<compile_context>
chip_gen: v7x
topology: tpu7x:2x2x1
jax: 0.10.0
libtpu: 0.0.40
codegen_flags: <defaults>
</compile_context>

<pallas_src>
import math
import functools

import jax
import jax.numpy as jnp
from jax import lax
from jax.experimental import pallas as pl
from jax.experimental.pallas import tpu as pltpu


# ---------------------------------------------------------------------------
# Tiled projection matmul (nn.Linear, bias=False): y = x @ w   (w = W.T)
# ---------------------------------------------------------------------------

def _matmul_kernel(x_ref, w_ref, o_ref, acc_ref):
    @pl.when(pl.program_id(2) == 0)
    def _():
        acc_ref[...] = jnp.zeros_like(acc_ref)

    acc_ref[...] += jnp.dot(x_ref[...], w_ref[...],
                            preferred_element_type=jnp.float32)

    @pl.when(pl.program_id(2) == pl.num_programs(2) - 1)
    def _():
        o_ref[...] = acc_ref[...].astype(o_ref.dtype)


def _pick_tile(dim, target):
    """Largest clean tile: `target` if it divides `dim`, else the full dim."""
    return target if (dim % target == 0) else dim


def pallas_linear(x2d, w, *, tm=256, tn=256, tk=512):
    """x2d: [N, K] @ w: [K, H] -> [N, H]; tiled, pipelined MXU matmul."""
    N, Kin = x2d.shape
    _, Hout = w.shape
    tm = _pick_tile(N, tm)
    tn = _pick_tile(Hout, tn)
    tk = _pick_tile(Kin, tk)
    grid = (N // tm, Hout // tn, Kin // tk)
    cost = pl.CostEstimate(
        flops=2 * N * Kin * Hout,
        transcendentals=0,
        bytes_accessed=4 * (N * Kin + Kin * Hout + N * Hout),
    )
    return pl.pallas_call(
        _matmul_kernel,
        out_shape=jax.ShapeDtypeStruct((N, Hout), x2d.dtype),
        grid=grid,
        in_specs=[
            pl.BlockSpec((tm, tk), lambda i, j, k: (i, k)),
            pl.BlockSpec((tk, tn), lambda i, j, k: (k, j)),
        ],
        out_specs=pl.BlockSpec((tm, tn), lambda i, j, k: (i, j)),
        scratch_shapes=[pltpu.VMEM((tm, tn), jnp.float32)],
        compiler_params=pltpu.CompilerParams(
            dimension_semantics=("parallel", "parallel", "arbitrary"),
            vmem_limit_bytes=48 * 1024 * 1024,
        ),
        cost_estimate=cost,
    )(x2d, w)


# ---------------------------------------------------------------------------
# Fused banded multi-head attention kernel
#   q: [B, M, H]  k, v: [B, W, H]  bias: [B, K, M, W]  ->  out: [B, M, H]
#   (W = M + attn_span; bias holds the pre-scaled skewed positional scores)
# ---------------------------------------------------------------------------

def _banded_attn_kernel(q_ref, k_ref, v_ref, bias_ref, o_ref, *,
                        nb_heads, head_dim, attn_span, scale):
    Kh, D, L = nb_heads, head_dim, attn_span
    M = q_ref.shape[1]
    W = k_ref.shape[1]

    # band mask in full key coordinates:  i <= c < i + L
    rows = lax.broadcasted_iota(jnp.int32, (M, W), 0)
    cols = lax.broadcasted_iota(jnp.int32, (M, W), 1)
    band = (cols >= rows) & (cols < rows + L)
    neg = jnp.float32(-1e30)

    out_parts = []
    for h in range(Kh):                       # static, all heads resident
        sl = pl.ds(h * D, D)
        qh = q_ref[0, :, sl] * scale          # [M, D]   (scale folded into Q)
        kh = k_ref[0, :, sl]                  # [W, D]
        vh = v_ref[0, :, sl]                  # [W, D]

        # content scores: S[i, c] = <Q[i], K[c]>  (MXU, contraction on D)
        s = lax.dot_general(qh, kh, (((1,), (1,)), ((), ())),
                            preferred_element_type=jnp.float32)      # [M, W]
        s = s + bias_ref[0, h]                # skewed positional scores
        s = jnp.where(band, s, neg)

        m = jnp.max(s, axis=-1, keepdims=True)
        p = jnp.exp(s - m)
        denom = jnp.sum(p, axis=-1, keepdims=True)
        attn = p * pl.reciprocal(denom, approx=True)                 # softmax

        # out[i] = sum_c attn[i, c] * V[c]   (MXU)
        out_h = jnp.dot(attn.astype(vh.dtype), vh,
                        preferred_element_type=jnp.float32)          # [M, D]
        out_parts.append(out_h)

    # single lane-dense [M, H] store (heads contiguous along lanes)
    o_ref[0] = jnp.concatenate(out_parts, axis=-1).astype(o_ref.dtype)


def pallas_banded_attention(q, k, v, bias, *, nb_heads, head_dim, attn_span):
    B, M, H = q.shape
    W = k.shape[1]
    Kh, D, L = nb_heads, head_dim, attn_span
    scale = 1.0 / math.sqrt(D)
    kernel = functools.partial(_banded_attn_kernel, nb_heads=Kh, head_dim=D,
                               attn_span=L, scale=scale)
    cost = pl.CostEstimate(
        flops=int(4 * B * Kh * M * W * D + 8 * B * Kh * M * W),
        transcendentals=int(B * Kh * M * W),
        bytes_accessed=int(4 * (2 * B * M * H + 2 * B * W * H + B * Kh * M * W)),
    )
    return pl.pallas_call(
        kernel,
        out_shape=jax.ShapeDtypeStruct((B, M, H), q.dtype),
        grid=(B,),
        in_specs=[
            pl.BlockSpec((1, M, H), lambda b: (b, 0, 0)),
            pl.BlockSpec((1, W, H), lambda b: (b, 0, 0)),
            pl.BlockSpec((1, W, H), lambda b: (b, 0, 0)),
            pl.BlockSpec((1, Kh, M, W), lambda b: (b, 0, 0, 0)),
        ],
        out_specs=pl.BlockSpec((1, M, H), lambda b: (b, 0, 0)),
        compiler_params=pltpu.CompilerParams(
            dimension_semantics=("parallel",),
            vmem_limit_bytes=48 * 1024 * 1024,
        ),
        cost_estimate=cost,
    )(q, k, v, bias)


# ---------------------------------------------------------------------------
# MultiHeadSeqAttention forward
# ---------------------------------------------------------------------------

def _skew_bias(pos):
    """torch `_skew` with pad 0 over the last two dims: [..., M, L] -> [..., M, M+L]."""
    Bq, Kq, Mq, Lq = pos.shape
    x = jnp.pad(pos, ((0, 0), (0, 0), (0, 0), (0, Mq + 1)))
    x = x.reshape(Bq, Kq, Mq * (Mq + Lq + 1))
    x = x[:, :, :-Mq]
    return x.reshape(Bq, Kq, Mq, Mq + Lq)


def multihead_seq_attention(query, key, value, key_pe, params, nb_heads):
    B, M, H = query.shape
    K = nb_heads
    D = H // K
    W = key.shape[1]
    L = W - M                      # attn_span (implied by the key length)
    scale = 1.0 / math.sqrt(D)

    # nn.Linear(bias=False): y = x @ W.T   (weights transposed once, tiny)
    q = pallas_linear(query.reshape(-1, H), params["wq"].T).reshape(B, M, H)
    k = pallas_linear(key.reshape(-1, H),   params["wk"].T).reshape(B, W, H)
    v = pallas_linear(value.reshape(-1, H), params["wv"].T).reshape(B, W, H)

    # positional scores (pre-scaled) skewed to full key coordinates; the
    # reshape is a free view and the skew is a cheap pad/reshape.
    qh = q.reshape(B, M, K, D)
    pos = jnp.einsum("bmkd,dl->bkml", qh, key_pe[0] * scale)   # [B, K, M, L]
    bias = _skew_bias(pos)                                     # [B, K, M, W]

    out = pallas_banded_attention(q, k, v, bias,
                                  nb_heads=K, head_dim=D, attn_span=L)
    out = pallas_linear(out.reshape(-1, H), params["wo"].T).reshape(B, M, H)
    return out
    # TODO(synk): kspectral / select_eigvectors branch not implemented
    #             (module default kspectral=False).


# ---------------------------------------------------------------------------
# Pure-JAX reference (mirrors the PyTorch forward with _skew/_unskew)
# ---------------------------------------------------------------------------

def _unskew_ref(X):
    Bx, M, Lt = X.shape
    L = Lt - M
    X = X.reshape(Bx, -1)
    X = jnp.pad(X, ((0, 0), (0, M)))
    X = X.reshape(Bx, M, M + L + 1)
    return X[:, :, :L]


def _skew_ref(X, pad_value):
    Bx, M, L = X.shape
    X = jnp.pad(X, ((0, 0), (0, 0), (0, M + 1)), constant_values=pad_value)
    X = X.reshape(Bx, -1)
    X = X[:, :-M]
    return X.reshape(Bx, M, M + L)


def reference_forward(query, key, value, key_pe, params, nb_heads):
    B, M, H = query.shape
    K = nb_heads
    D = H // K

    def proj(x, w):
        return x @ w.T

    def head_reshape(x):
        Bx, T, _ = x.shape
        return x.reshape(Bx, T, K, D).transpose(0, 2, 1, 3).reshape(Bx * K, T, D)

    q = head_reshape(proj(query, params["wq"]))
    v = head_reshape(proj(value, params["wv"]))
    k = head_reshape(proj(key, params["wk"]))

    attn_cont = jnp.matmul(q, jnp.swapaxes(k, -1, -2))
    attn_cont = _unskew_ref(attn_cont)
    attn_pos = jnp.matmul(q, key_pe)
    attn = (attn_cont + attn_pos) / math.sqrt(D)
    attn = jax.nn.softmax(attn, axis=-1)
    attn_sk = _skew_ref(attn, 0.0)
    out = jnp.matmul(attn_sk, v)

    out = out.reshape(B, K, M, D).transpose(0, 2, 1, 3).reshape(B, M, H)
    return out @ params["wo"].T


# ---------------------------------------------------------------------------

if __name__ == "__main__":
    B = 2
    hidden_size = 32
    nb_heads = 4
    head_dim = hidden_size // nb_heads
    M = 8            # query length
    attn_span = 8    # span of past tokens
    Lkv = M + attn_span

    key0 = jax.random.PRNGKey(0)
    k_q, k_k, k_v, k_pe, k_wq, k_wk, k_wv, k_wo = jax.random.split(key0, 8)

    query = jax.random.normal(k_q, (B, M, hidden_size), jnp.float32)
    key = jax.random.normal(k_k, (B, Lkv, hidden_size), jnp.float32)
    value = jax.random.normal(k_v, (B, Lkv, hidden_size), jnp.float32)
    key_pe = jax.random.normal(k_pe, (1, head_dim, attn_span), jnp.float32)

    params = {
        "wq": jax.random.normal(k_wq, (hidden_size, hidden_size), jnp.float32) * 0.1,
        "wk": jax.random.normal(k_wk, (hidden_size, hidden_size), jnp.float32) * 0.1,
        "wv": jax.random.normal(k_wv, (hidden_size, hidden_size), jnp.float32) * 0.1,
        "wo": jax.random.normal(k_wo, (hidden_size, hidden_size), jnp.float32) * 0.1,
    }

    out = multihead_seq_attention(query, key, value, key_pe, params, nb_heads)
    out = jax.block_until_ready(out)

    ref = reference_forward(query, key, value, key_pe, params, nb_heads)
    assert out.shape == (B, M, hidden_size)
    assert jnp.allclose(out, ref, rtol=5e-3, atol=5e-3), (
        f"max abs diff = {jnp.max(jnp.abs(out - ref))}"
    )
    print("KERNEL_OK")
</pallas_src>

<mosaic_0001>
module attributes {stable_mosaic.version = 11 : i64} {
  func.func @_matmul_kernel(%arg0: i32, %arg1: i32, %arg2: i32, %arg3: memref<16x32xf32, #tpu.memory_space<vmem>>, %arg4: memref<32x32xf32, #tpu.memory_space<vmem>>, %arg5: memref<16x32xf32, #tpu.memory_space<vmem>>, %arg6: memref<16x32xf32, #tpu.memory_space<vmem>>) attributes {dimension_semantics = [#tpu.dimension_semantics<parallel>, #tpu.dimension_semantics<parallel>, #tpu.dimension_semantics<arbitrary>], iteration_bounds = array<i64: 1, 1, 1>, scalar_prefetch = 0 : i64, scratch_operands = 1 : i64, tpu.core_type = #tpu.core_type<tc>, window_params = [{transform_indices = @transform_0, window_bounds = array<i64: 16, 32>}, {transform_indices = @transform_1, window_bounds = array<i64: 32, 32>}, {transform_indices = @transform_2, window_bounds = array<i64: 16, 32>}]} {
    %c0_i32 = arith.constant 0 : i32
    %0 = arith.cmpi eq, %arg2, %c0_i32 : i32
    %1 = arith.extui %0 : i1 to i32
    %c0_i32_0 = arith.constant 0 : i32
    %2 = arith.cmpi ne, %1, %c0_i32_0 : i32
    scf.if %2 {
      %cst_10 = arith.constant 0.000000e+00 : f32
      %12 = vector.broadcast %cst_10 : f32 to vector<16x32xf32>
      %c0_11 = arith.constant 0 : index
      %c0_12 = arith.constant 0 : index
      %13 = vector.load %arg6[%c0_11, %c0_12] : memref<16x32xf32, #tpu.memory_space<vmem>>, vector<16x32xf32>
      tpu.vector_store %arg6[%c0_11, %c0_12], %12 {strides = array<i32>} : memref<16x32xf32, #tpu.memory_space<vmem>>, vector<16x32xf32>,
    } else {
    }
    %c0 = arith.constant 0 : index
    %c0_1 = arith.constant 0 : index
    %3 = vector.load %arg6[%c0, %c0_1] : memref<16x32xf32, #tpu.memory_space<vmem>>, vector<16x32xf32>
    %c0_2 = arith.constant 0 : index
    %c0_3 = arith.constant 0 : index
    %4 = vector.load %arg3[%c0_2, %c0_3] : memref<16x32xf32, #tpu.memory_space<vmem>>, vector<16x32xf32>
    %c0_4 = arith.constant 0 : index
    %c0_5 = arith.constant 0 : index
    %5 = vector.load %arg4[%c0_4, %c0_5] : memref<32x32xf32, #tpu.memory_space<vmem>>, vector<32x32xf32>
    %cst = arith.constant dense<0.000000e+00> : vector<16x32xf32>
    %6 = tpu.matmul %4, %5, %cst {dimension_numbers = #tpu.dot_dimension_numbers<[1], [0], [0], [1], [0, 0, 1, 1], [], []>} : vector<16x32xf32>, vector<32x32xf32>, vector<16x32xf32> -> vector<16x32xf32>
    %7 = arith.addf %3, %6 : vector<16x32xf32>
    %c0_6 = arith.constant 0 : index
    %c0_7 = arith.constant 0 : index
    %8 = vector.load %arg6[%c0_6, %c0_7] : memref<16x32xf32, #tpu.memory_space<vmem>>, vector<16x32xf32>
    tpu.vector_store %arg6[%c0_6, %c0_7], %7 {strides = array<i32>} : memref<16x32xf32, #tpu.memory_space<vmem>>, vector<16x32xf32>,
    %c0_i32_8 = arith.constant 0 : i32
    %9 = arith.cmpi eq, %arg2, %c0_i32_8 : i32
    %10 = arith.extui %9 : i1 to i32
    %c0_i32_9 = arith.constant 0 : i32
    %11 = arith.cmpi ne, %10, %c0_i32_9 : i32
    scf.if %11 {
      %c0_10 = arith.constant 0 : index
      %c0_11 = arith.constant 0 : index
      %12 = vector.load %arg6[%c0_10, %c0_11] : memref<16x32xf32, #tpu.memory_space<vmem>>, vector<16x32xf32>
      %c0_12 = arith.constant 0 : index
      %c0_13 = arith.constant 0 : index
      %13 = vector.load %arg5[%c0_12, %c0_13] : memref<16x32xf32, #tpu.memory_space<vmem>>, vector<16x32xf32>
      tpu.vector_store %arg5[%c0_12, %c0_13], %12 {strides = array<i32>} : memref<16x32xf32, #tpu.memory_space<vmem>>, vector<16x32xf32>,
    } else {
    }
    return
  }
  func.func @transform_0(%arg0: i32, %arg1: i32, %arg2: i32) -> (i32, i32) {
    %c0_i32 = arith.constant 0 : i32
    return %arg0, %arg2 : i32, i32
  }
  func.func @transform_1(%arg0: i32, %arg1: i32, %arg2: i32) -> (i32, i32) {
    %c0_i32 = arith.constant 0 : i32
    return %arg2, %arg1 : i32, i32
  }
  func.func @transform_2(%arg0: i32, %arg1: i32, %arg2: i32) -> (i32, i32) {
    %c0_i32 = arith.constant 0 : i32
    return %arg0, %arg1 : i32, i32
  }
}

</mosaic_0001>

<llo_original>
// kernel: tpu_custom_call.1
$region0: #{tpu_custom_call.1}
  #allocation0 [shape = 'u32[]', space=smem, size = 0x4, offset = 0x4, fixed_abs, tag = 'smem constant byte address 0x4 - core index']
  #allocation1 [shape = 'u32[144,128]{1,0:T(1,128)}', space=vmem, size = 0x12000, scoped, tag = 'internal scratch']
  #allocation2 [shape = 'f32[16,32]{1,0:T(8,128)}', space=vmem, size = 0x2000, scoped, tag = 'scratch operand']
  %s0 = inlined_call_operand.hbm [shape: f32[16,32], index: 0, kind: input, shape index: {}]
  %s1 = inlined_call_operand.hbm [shape: f32[32,32], index: 1, kind: input, shape index: {}]
  %s2 = inlined_call_operand.hbm [shape: f32[16,32], index: 2, kind: output, shape index: {}]
  %s3 = sld [smem:[#allocation0]]
  $region34: #{tpu_custom_call.1} parent=0
    _
  %s5 = ssub.s32 1, %s3
  %s6 = scalar_select 0, %s5, %s3
  $region1: #{tpu_custom_call.1} parent=0
    #allocation3 [shape = 'u8[8192]{0}', space=vmem, size = 0x2000, scoped, tag = 'input window, operand 0, single buffered']
    #allocation4 [shape = 's32[1]{0}', space=sflag, size = 0x4, scoped, tag = 'scoped memory for tpu_custom_call.1']
    #allocation5 [shape = 's32[1]{0}', space=sflag, size = 0x4, scoped, tag = 'scoped memory for tpu_custom_call.1']
    #allocation6 [shape = 'u8[16384]{0}', space=vmem, size = 0x4000, scoped, tag = 'input window, operand 1, single buffered']
    #allocation7 [shape = 's32[1]{0}', space=sflag, size = 0x4, scoped, tag = 'scoped memory for tpu_custom_call.1']
    #allocation8 [shape = 'u8[8192]{0}', space=vmem, size = 0x2000, scoped, tag = 'output window, operand 0, single buffered']
    %7 = vsyncpa [#allocation4], 0
    %8 = vsyncpa [#allocation7], 0
    %9 = vsyncpa [#allocation5], 0
    // Predicated region
    $region2: #{tpu_custom_call.1} parent=1 // pred_check
      _
    $region3: #{tpu_custom_call.1} parent=1 // pred_check_branch
      %11 = sbr.rel (0) target = $region5
    $region4: #{tpu_custom_call.1} parent=1 // pred_region
      %s13 = ssub.s32 256, 256
      %14 = vsyncadd [#allocation4], %s13
      %s15 = sshll.u32 [#allocation3], 4
      %s16 = int_to_ptr.vmem [resolvable:$true] %s15
      %21 = dma.hbm_to_vmem [thread:$0]  %s0, 256, %s16, [#allocation4], 128, 128, 8
    $region5: #{tpu_custom_call.1} parent=1 // pred_fallthru
      _
    // Predicated region
    $region6: #{tpu_custom_call.1} parent=1 // pred_check
      _
    $region7: #{tpu_custom_call.1} parent=1 // pred_check_branch
      %23 = sbr.rel (0) target = $region9
    $region8: #{tpu_custom_call.1} parent=1 // pred_region
      %s25 = ssub.s32 512, 512
      %26 = vsyncadd [#allocation7], %s25
      %s27 = sshll.u32 [#allocation6], 4
      %s28 = int_to_ptr.vmem [resolvable:$true] %s27
      %33 = dma.hbm_to_vmem [thread:$0]  %s1, 512, %s28, [#allocation7], 128, 128, 8
    $region9: #{tpu_custom_call.1} parent=1 // pred_fallthru
      _
    // Predicated region
    $region10: #{tpu_custom_call.1} parent=1 // pred_check
      _
    $region11: #{tpu_custom_call.1} parent=1 // pred_check_branch
      %35 = sbr.rel (0) target = $region13
    $region12: #{tpu_custom_call.1} parent=1 // pred_region
      %36 = dma.done [#allocation4], 256
    $region13: #{tpu_custom_call.1} parent=1 // pred_fallthru
      _
    // Predicated region
    $region14: #{tpu_custom_call.1} parent=1 // pred_check
      _
    $region15: #{tpu_custom_call.1} parent=1 // pred_check_branch
      %38 = sbr.rel (0) target = $region17
    $region16: #{tpu_custom_call.1} parent=1 // pred_region
      %39 = dma.done [#allocation7], 512
    $region17: #{tpu_custom_call.1} parent=1 // pred_fallthru
      _
    %p40 = scmp.eq.s32.totalorder 0, 0
    // Predicated region
    $region18: #{tpu_custom_call.1} parent=1 // pred_check
      %p41 = pneg %p40
    $region19: #{tpu_custom_call.1} parent=1 // pred_check_branch
      %43 = sbr.rel (%p41) target = $region21
    $region20: #{tpu_custom_call.1} parent=1 // pred_region
      %vm44 = vcmask 261120
      %45 = vst.msk [vmem:[#allocation2] sm:$0xff] %vm44, 0.0
      %46 = vst.msk [vmem:[#allocation2 + $0x8] sm:$0xff] %vm44, 0.0
    $region21: #{tpu_custom_call.1} parent=1 // pred_fallthru
      _
    %v47 = vld [vmem:[#allocation2] sm:$0xff]
    %v48 = vld [vmem:[#allocation2 + $0x8] sm:$0xff]
    %v49 = vld [vmem:[#allocation3] sm:$0xff]
    %v50 = vld [vmem:[#allocation3 + $0x8] sm:$0xff]
    %v51 = vld [vmem:[#allocation6] sm:$0xff]
    %v52 = vld [vmem:[#allocation6 + $0x8] sm:$0xff]
    %v53 = vld [vmem:[#allocation6 + $0x10] sm:$0xff]
    %v54 = vld [vmem:[#allocation6 + $0x18] sm:$0xff]
    %vm55 = vcmask 261120
    %v57 = vsel %vm55, %v49, 0
    %v60 = vsel %vm55, %v50, 0
    %62 = vmatprep.subr.mxu0 0.0
    %63 = vmatpush1.msra.mxu0 %v51
    %64 = vmatprep.subr.mxu0 0.0
    %65 = vmatpush1.msra.mxu0 %v52
    %66 = vmatprep.subr.mxu0 0.0
    %67 = vmatpush1.msra.mxu0 %v53
    %68 = vmatprep.subr.mxu0 0.0
    %69 = vmatpush1.msra.mxu0 %v54
    %70 = vmatprep.subr.mxu0 0.0
    %71 = vmatpush1.msra.mxu0 0.0
    %72 = vmatprep.subr.mxu0 0.0
    %73 = vmatpush1.msra.mxu0 0.0
    %74 = vmatprep.subr.mxu0 0.0
    %75 = vmatpush1.msra.mxu0 0.0
    %76 = vmatprep.subr.mxu0 0.0
    %77 = vmatpush1.msra.mxu0 0.0
    %78 = vmatprep.subr.mxu0 0.0
    %79 = vmatpush1.msra.mxu0 0.0
    %80 = vmatprep.subr.mxu0 0.0
    %81 = vmatpush1.msra.mxu0 0.0
    %82 = vmatprep.subr.mxu0 0.0
    %83 = vmatpush1.msra.mxu0 0.0
    %84 = vmatprep.subr.mxu0 0.0
    %85 = vmatpush1.msra.mxu0 0.0
    %86 = vmatprep.subr.mxu0 0.0
    %87 = vmatpush1.msra.mxu0 0.0
    %88 = vmatprep.subr.mxu0 0.0
    %89 = vmatpush1.msra.mxu0 0.0
    %90 = vmatprep.subr.mxu0 0.0
    %91 = vmatpush1.msra.mxu0 0.0
    %92 = vmatprep.subr.mxu0 0.0
    %93 = vmatpush1.msra.mxu0 0.0
    %94 = vmatprep.subr.mxu0 0.0
    %95 = vmatpush1.msra.mxu0 0.0
    %96 = vmatprep.subr.mxu0 0.0
    %97 = vmatpush1.msra.mxu0 0.0
    %98 = vmatprep.subr.mxu0 0.0
    %99 = vmatpush1.msra.mxu0 0.0
    %100 = vmatprep.subr.mxu0 0.0
    %101 = vmatpush1.msra.mxu0 0.0
    %102 = vmatprep.subr.mxu0 0.0
    %103 = vmatpush1.msra.mxu0 0.0
    %104 = vmatprep.subr.mxu0 0.0
    %105 = vmatpush1.msra.mxu0 0.0
    %106 = vmatprep.subr.mxu0 0.0
    %107 = vmatpush1.msra.mxu0 0.0
    %108 = vmatprep.subr.mxu0 0.0
    %109 = vmatpush1.msra.mxu0 0.0
    %110 = vmatprep.subr.mxu0 0.0
    %111 = vmatpush1.msra.mxu0 0.0
    %112 = vmatprep.subr.mxu0 0.0
    %113 = vmatpush1.msra.mxu0 0.0
    %114 = vmatprep.subr.mxu0 0.0
    %115 = vmatpush1.msra.mxu0 0.0
    %116 = vmatprep.subr.mxu0 0.0
    %117 = vmatpush1.msra.mxu0 0.0
    %118 = vmatprep.subr.mxu0 0.0
    %119 = vmatpush1.msra.mxu0 0.0
    %120 = vmatprep.subr.mxu0 0.0
    %121 = vmatpush1.msra.mxu0 0.0
    %122 = vmatprep.subr.mxu0 0.0
    %123 = vmatpush1.msra.mxu0 0.0
    %124 = vmatprep.subr.mxu0 0.0
    %125 = vmatpush1.msra.mxu0 0.0
    %126 = vmatprep.mubr.f32.mxu0 0.0
    %127 = vmatmul.mubr.f32.gmra.mrb[0].mxu0 %v57
    %v128 = vpop.f32.mrb[0].mxu0
    %v129 = vadd.f32 0.0, %v128
    %v130 = vpop.f32.mrb[0].mxu0
    %131 = vmatprep.mubr.f32.mxu0 0.0
    %132 = vmatmul.mubr.f32.gmra.mrb[0].mxu0 %v60
    %v133 = vpop.f32.mrb[0].mxu0
    %v134 = vadd.f32 0.0, %v133
    %v135 = vpop.f32.mrb[0].mxu0
    %136 = vdwg.mxu0
    %v137 = vadd.f32 %v47, %v129
    %v138 = vadd.f32 %v48, %v134
    %139 = vst.msk [vmem:[#allocation2] sm:$0xff] %vm55, %v137
    %140 = vst.msk [vmem:[#allocation2 + $0x8] sm:$0xff] %vm55, %v138
    // Predicated region
    $region22: #{tpu_custom_call.1} parent=1 // pred_check
      %p141 = pneg %p40
    $region23: #{tpu_custom_call.1} parent=1 // pred_check_branch
      %143 = sbr.rel (%p141) target = $region25
    $region24: #{tpu_custom_call.1} parent=1 // pred_region
      %v144 = vld [vmem:[#allocation2] sm:$0xff]
      %v145 = vld [vmem:[#allocation2 + $0x8] sm:$0xff]
      %146 = vst.msk [vmem:[#allocation8] sm:$0xff] %vm55, %v144
      %147 = vst.msk [vmem:[#allocation8 + $0x8] sm:$0xff] %vm55, %v145
    $region25: #{tpu_custom_call.1} parent=1 // pred_fallthru
      _
    // Predicated region
    $region26: #{tpu_custom_call.1} parent=1 // pred_check
      _
    $region27: #{tpu_custom_call.1} parent=1 // pred_check_branch
      %149 = sbr.rel (0) target = $region29
    $region28: #{tpu_custom_call.1} parent=1 // pred_region
      %s151 = ssub.s32 256, 256
      %152 = vsyncadd [#allocation5], %s151
      %s153 = sshll.u32 [#allocation8], 4
      %s154 = int_to_ptr.vmem [resolvable:$true] %s153
      %159 = dma.vmem_to_hbm [thread:$0]  %s154, 256, %s2, [#allocation5], 128, 128, 8
    $region29: #{tpu_custom_call.1} parent=1 // pred_fallthru
      _
    // Predicated region
    $region30: #{tpu_custom_call.1} parent=1 // pred_check
      _
    $region31: #{tpu_custom_call.1} parent=1 // pred_check_branch
      %161 = sbr.rel (0) target = $region33
    $region32: #{tpu_custom_call.1} parent=1 // pred_region
      %162 = dma.done [#allocation5], 256
    $region33: #{tpu_custom_call.1} parent=1 // pred_fallthru
      _
    %163 = vsyncpa [#allocation4], 1
    %164 = vsyncpa [#allocation7], 1
    %165 = vsyncpa [#allocation5], 1

</llo_original>
